<compile_context>
chip_gen: v6e
topology: v6e:2x2x1
jax: 0.10.0
libtpu: 0.0.40
codegen_flags: <defaults>
</compile_context>

<pallas_src>
import functools

import jax
import jax.numpy as jnp
from jax.experimental import pallas as pl
from jax.experimental.pallas import tpu as pltpu

EPS = 1e-5


def _round_up(x, m):
    return ((x + m - 1) // m) * m


def _conv_stats_kernel(x_ref, w_ref, b_ref, y_ref, stats_ref, *, s_valid, ts):
    """Pass 1: conv (single im2col matmul) + bias, plus per-tile partial BN stats.

    x_ref:     (K*K*Cin, TS)   bf16  im2col'd activation tile (spatial on lanes)
    w_ref:     (Cout, K*K*Cin) bf16  transposed conv weight
    b_ref:     (Cout, 1)       f32   conv bias
    y_ref:     (Cout, TS)      f32   conv output tile
    stats_ref: (Cout, 2)       f32   per-tile [sum, sum_of_squares] per channel
    """
    s_idx = pl.program_id(1)
    y = jax.lax.dot_general(
        w_ref[...], x_ref[...],
        dimension_numbers=(((1,), (0,)), ((), ())),
        preferred_element_type=jnp.float32)            # (Cout, TS) on the MXU
    y = y + b_ref[...]
    y_ref[...] = y

    # Partial batch statistics; mask out spatial padding columns (if any).
    col = jax.lax.broadcasted_iota(jnp.int32, y.shape, 1) + s_idx * ts
    mask = (col < s_valid).astype(jnp.float32)
    ym = y * mask
    stats_ref[:, 0:1] = jnp.sum(ym, axis=1, keepdims=True)
    stats_ref[:, 1:2] = jnp.sum(ym * y, axis=1, keepdims=True)


def _bn_relu_kernel(y_ref, scale_ref, shift_ref, o_ref):
    """Pass 2: y * scale + shift, then ReLU. scale/shift are (Cout, 1)."""
    o_ref[...] = jnp.maximum(y_ref[...] * scale_ref[...] + shift_ref[...], 0.0)


@functools.partial(jax.jit, static_argnames=("kernel_size", "stride", "tile_s"))
def deconv_layer_forward(x_nchw, w_hwio, bias, gamma, beta, *,
                         kernel_size, stride=1, tile_s=512):
    """DeconvLayer forward (pad='reflect', activation='relu',
    normalization='batch' (training-mode batch stats), upsample='nearest')."""
    assert stride == 1  # TODO(synk): stride > 1 not implemented (decoder path uses stride=1).
    n, cin, h, w = x_nchw.shape
    k = kernel_size
    cout = w_hwio.shape[-1]
    p = k // 2

    # --- glue: nearest 2x upsample + reflection pad (pure index arithmetic) ---
    # TODO(synk): fusing the upsample/pad/im2col gather into the kernel's input DMA
    # needs element-indexed (overlapping) BlockSpecs or manual make_async_copy;
    # kept in XLA here.
    x_up = jnp.repeat(jnp.repeat(x_nchw, 2, axis=2), 2, axis=3)          # (N, Cin, 2H, 2W)
    x_pad = jnp.pad(x_up, ((0, 0), (0, 0), (p, p), (p, p)), mode="reflect")
    hp, wp = x_pad.shape[2], x_pad.shape[3]
    ho, wo = hp - k + 1, wp - k + 1
    s = ho * wo
    kkcin = k * k * cin

    # --- glue: im2col -> (N, K*K*Cin, Ho*Wo), contraction ordered (kh, kw, cin) ---
    cols = [x_pad[:, :, kh:kh + ho, kw:kw + wo]
            for kh in range(k) for kw in range(k)]                       # each (N, Cin, Ho, Wo)
    x_col = jnp.stack(cols, axis=1).reshape(n, kkcin, s).astype(jnp.bfloat16)

    # Weight (K, K, Cin, Cout) -> (Cout, K*K*Cin), same (kh, kw, cin) ordering.
    w_t = jnp.transpose(w_hwio.reshape(kkcin, cout)).astype(jnp.bfloat16)
    b_col = bias.reshape(cout, 1).astype(jnp.float32)

    # --- spatial tiling (lanes) ---
    ts = min(tile_s, _round_up(s, 128))       # lane tile; raise tile_s for big images
    s_pad = _round_up(s, ts)
    num_tiles = s_pad // ts
    if s_pad != s:
        x_col = jnp.pad(x_col, ((0, 0), (0, 0), (0, s_pad - s)))

    # --- pass 1: conv + bias + per-tile partial stats ---
    y, stats = pl.pallas_call(
        functools.partial(_conv_stats_kernel, s_valid=s, ts=ts),
        grid=(n, num_tiles),
        in_specs=[
            pl.BlockSpec((None, kkcin, ts), lambda b, si: (b, 0, si)),   # x_col tile
            pl.BlockSpec((cout, kkcin), lambda b, si: (0, 0)),           # W^T (resident)
            pl.BlockSpec((cout, 1), lambda b, si: (0, 0)),               # bias
        ],
        out_specs=[
            pl.BlockSpec((None, cout, ts), lambda b, si: (b, 0, si)),          # conv out
            pl.BlockSpec((None, None, cout, 2), lambda b, si: (b, si, 0, 0)),  # partial stats
        ],
        out_shape=[
            jax.ShapeDtypeStruct((n, cout, s_pad), jnp.float32),
            jax.ShapeDtypeStruct((n, num_tiles, cout, 2), jnp.float32),
        ],
        compiler_params=pltpu.CompilerParams(
            dimension_semantics=("parallel", "parallel")),
    )(x_col, w_t, b_col)

    # --- tiny reduction: global batch stats -> per-channel scale/shift ---
    tot = jnp.sum(stats, axis=(0, 1))                       # (Cout, 2)
    count = float(n * s)
    mean = tot[:, 0] / count
    var = jnp.maximum(tot[:, 1] / count - mean * mean, 0.0)  # biased, training-mode BN
    scale = gamma.astype(jnp.float32) * jax.lax.rsqrt(var + EPS)
    shift = beta.astype(jnp.float32) - mean * scale
    # TODO(synk): running_mean / running_var updates (PyTorch BN training state) not emitted.

    # --- pass 2: normalize + ReLU ---
    out = pl.pallas_call(
        _bn_relu_kernel,
        grid=(n, num_tiles),
        in_specs=[
            pl.BlockSpec((None, cout, ts), lambda b, si: (b, 0, si)),
            pl.BlockSpec((cout, 1), lambda b, si: (0, 0)),
            pl.BlockSpec((cout, 1), lambda b, si: (0, 0)),
        ],
        out_specs=pl.BlockSpec((None, cout, ts), lambda b, si: (b, 0, si)),
        out_shape=jax.ShapeDtypeStruct((n, cout, s_pad), jnp.float32),
        compiler_params=pltpu.CompilerParams(
            dimension_semantics=("parallel", "parallel")),
    )(y, scale.reshape(cout, 1), shift.reshape(cout, 1))

    # (N, Cout, Ho*Wo) is already NCHW-ordered: drop spatial padding and reshape (free).
    return out[:, :, :s].reshape(n, cout, ho, wo)


def _reference_forward(x_nchw, w_hwio, bias, gamma, beta, *, kernel_size):
    """Pure-JAX f32 reference mirroring the PyTorch forward."""
    k = kernel_size
    p = k // 2
    x_up = jnp.repeat(jnp.repeat(x_nchw, 2, axis=2), 2, axis=3)
    x_pad = jnp.pad(x_up, ((0, 0), (0, 0), (p, p), (p, p)), mode="reflect")
    y = jax.lax.conv_general_dilated(
        x_pad, w_hwio, window_strides=(1, 1), padding="VALID",
        dimension_numbers=("NCHW", "HWIO", "NCHW"))
    y = y + bias[None, :, None, None]
    mean = jnp.mean(y, axis=(0, 2, 3), keepdims=True)
    var = jnp.mean((y - mean) ** 2, axis=(0, 2, 3), keepdims=True)
    y = (y - mean) * jax.lax.rsqrt(var + EPS)
    y = y * gamma[None, :, None, None] + beta[None, :, None, None]
    return jnp.maximum(y, 0.0)


if __name__ == "__main__":
    # Config consistent with the module: in_ch=4, out_ch=8, kernel_size=3, stride=1.
    N, IN_CH, OUT_CH, H, W, K = 2, 4, 8, 16, 16, 3

    key = jax.random.PRNGKey(0)
    kx, kw, kb = jax.random.split(key, 3)

    x = jax.random.normal(kx, (N, IN_CH, H, W), dtype=jnp.float32)
    # Deterministic synthetic parameters (shapes match nn.Conv2d / nn.BatchNorm2d).
    w_hwio = jax.random.normal(kw, (K, K, IN_CH, OUT_CH), dtype=jnp.float32) * 0.1
    bias = jax.random.normal(kb, (OUT_CH,), dtype=jnp.float32) * 0.1
    gamma = jnp.ones((OUT_CH,), dtype=jnp.float32)   # BatchNorm affine weight init
    beta = jnp.zeros((OUT_CH,), dtype=jnp.float32)   # BatchNorm affine bias init

    out = deconv_layer_forward(x, w_hwio, bias, gamma, beta, kernel_size=K, stride=1)
    out = jax.block_until_ready(out)

    ref = _reference_forward(x, w_hwio, bias, gamma, beta, kernel_size=K)
    assert out.shape == (N, OUT_CH, 2 * H, 2 * W), out.shape
    # Tolerance accounts for the bf16 MXU feed (reference conv runs in f32).
    err = float(jnp.max(jnp.abs(out - ref)))
    assert jnp.allclose(out, ref, atol=5e-2, rtol=5e-2), err

    print("KERNEL_OK")
</pallas_src>

<mosaic_0001>
module attributes {stable_mosaic.version = 11 : i64} {
  func.func @_conv_stats_kernel(%arg0: i32, %arg1: i32, %arg2: memref<1x36x512xbf16, #tpu.memory_space<vmem>>, %arg3: memref<8x36xbf16, #tpu.memory_space<vmem>>, %arg4: memref<8x1xf32, #tpu.memory_space<vmem>>, %arg5: memref<1x8x512xf32, #tpu.memory_space<vmem>>, %arg6: memref<1x1x8x2xf32, #tpu.memory_space<vmem>>) attributes {dimension_semantics = [#tpu.dimension_semantics<parallel>, #tpu.dimension_semantics<parallel>], iteration_bounds = array<i64: 2, 2>, scalar_prefetch = 0 : i64, scratch_operands = 0 : i64, tpu.core_type = #tpu.core_type<tc>, window_params = [{transform_indices = @transform_0, window_bounds = array<i64: 1, 36, 512>}, {pipeline_mode = #tpu.pipeline_mode<synchronous>, transform_indices = @transform_1, window_bounds = array<i64: 8, 36>}, {pipeline_mode = #tpu.pipeline_mode<synchronous>, transform_indices = @transform_2, window_bounds = array<i64: 8, 1>}, {transform_indices = @transform_3, window_bounds = array<i64: 1, 8, 512>}, {transform_indices = @transform_4, window_bounds = array<i64: 1, 1, 8, 2>}]} {
    %c0 = arith.constant 0 : index
    %c0_0 = arith.constant 0 : index
    %0 = vector.load %arg3[%c0, %c0_0] : memref<8x36xbf16, #tpu.memory_space<vmem>>, vector<8x36xbf16>
    %c0_1 = arith.constant 0 : index
    %c0_2 = arith.constant 0 : index
    %c0_3 = arith.constant 0 : index
    %1 = vector.load %arg2[%c0_1, %c0_2, %c0_3] : memref<1x36x512xbf16, #tpu.memory_space<vmem>>, vector<1x36x512xbf16>
    %2 = vector.shape_cast %1 : vector<1x36x512xbf16> to vector<36x512xbf16>
    %cst = arith.constant dense<0.000000e+00> : vector<8x512xf32>
    %3 = tpu.matmul %0, %2, %cst {dimension_numbers = #tpu.dot_dimension_numbers<[1], [0], [0], [1], [0, 0, 1, 1], [], []>} : vector<8x36xbf16>, vector<36x512xbf16>, vector<8x512xf32> -> vector<8x512xf32>
    %c0_4 = arith.constant 0 : index
    %c0_5 = arith.constant 0 : index
    %4 = vector.load %arg4[%c0_4, %c0_5] : memref<8x1xf32, #tpu.memory_space<vmem>>, vector<8x1xf32>
    %5 = vector.broadcast %4 : vector<8x1xf32> to vector<8x512xf32>
    %6 = arith.addf %3, %5 : vector<8x512xf32>
    %c0_6 = arith.constant 0 : index
    %c0_7 = arith.constant 0 : index
    %c0_8 = arith.constant 0 : index
    %7 = vector.load %arg5[%c0_6, %c0_7, %c0_8] : memref<1x8x512xf32, #tpu.memory_space<vmem>>, vector<1x8x512xf32>
    %8 = vector.shape_cast %7 : vector<1x8x512xf32> to vector<8x512xf32>
    %9 = vector.shape_cast %6 : vector<8x512xf32> to vector<1x8x512xf32>
    tpu.vector_store %arg5[%c0_6, %c0_7, %c0_8], %9 {strides = array<i32>} : memref<1x8x512xf32, #tpu.memory_space<vmem>>, vector<1x8x512xf32>,
    %10 = tpu.iota {dimensions = array<i32: 1>} : vector<8x512xi32>
    %c512_i32 = arith.constant 512 : i32
    %11 = arith.muli %arg1, %c512_i32 : i32
    %12 = vector.broadcast %11 : i32 to vector<8x512xi32>
    %13 = arith.addi %10, %12 : vector<8x512xi32>
    %c1024_i32 = arith.constant 1024 : i32
    %14 = vector.broadcast %c1024_i32 : i32 to vector<8x512xi32>
    %15 = arith.cmpi slt, %13, %14 : vector<8x512xi32>
    %16 = arith.extui %15 : vector<8x512xi1> to vector<8x512xi32>
    %17 = arith.sitofp %16 : vector<8x512xi32> to vector<8x512xf32>
    %18 = arith.mulf %6, %17 : vector<8x512xf32>
    %cst_9 = arith.constant dense<0.000000e+00> : vector<8xf32>
    %19 = vector.multi_reduction <add>, %18, %cst_9 [1] : vector<8x512xf32> to vector<8xf32>
    %20 = vector.shape_cast %19 : vector<8xf32> to vector<8x1xf32>
    %c0_10 = arith.constant 0 : index
    %c0_11 = arith.constant 0 : index
    %c0_12 = arith.constant 0 : index
    %c0_13 = arith.constant 0 : index
    %21 = vector.load %arg6[%c0_10, %c0_11, %c0_12, %c0_13] : memref<1x1x8x2xf32, #tpu.memory_space<vmem>>, vector<1x1x8x1xf32>
    %22 = vector.shape_cast %21 : vector<1x1x8x1xf32> to vector<8x1xf32>
    %23 = vector.shape_cast %20 : vector<8x1xf32> to vector<1x1x8x1xf32>
    tpu.vector_store %arg6[%c0_10, %c0_11, %c0_12, %c0_13], %23 {strides = array<i32>} : memref<1x1x8x2xf32, #tpu.memory_space<vmem>>, vector<1x1x8x1xf32>,
    %24 = arith.mulf %18, %6 : vector<8x512xf32>
    %cst_14 = arith.constant dense<0.000000e+00> : vector<8xf32>
    %25 = vector.multi_reduction <add>, %24, %cst_14 [1] : vector<8x512xf32> to vector<8xf32>
    %26 = vector.shape_cast %25 : vector<8xf32> to vector<8x1xf32>
    %c0_15 = arith.constant 0 : index
    %c0_16 = arith.constant 0 : index
    %c0_17 = arith.constant 0 : index
    %c1 = arith.constant 1 : index
    %27 = vector.load %arg6[%c0_15, %c0_16, %c0_17, %c1] : memref<1x1x8x2xf32, #tpu.memory_space<vmem>>, vector<1x1x8x1xf32>
    %28 = vector.shape_cast %27 : vector<1x1x8x1xf32> to vector<8x1xf32>
    %29 = vector.shape_cast %26 : vector<8x1xf32> to vector<1x1x8x1xf32>
    tpu.vector_store %arg6[%c0_15, %c0_16, %c0_17, %c1], %29 {strides = array<i32>} : memref<1x1x8x2xf32, #tpu.memory_space<vmem>>, vector<1x1x8x1xf32>,
    return
  }
  func.func @transform_0(%arg0: i32, %arg1: i32) -> (i32, i32, i32) {
    %c0_i32 = arith.constant 0 : i32
    %c0_i32_0 = arith.constant 0 : i32
    return %arg0, %c0_i32, %arg1 : i32, i32, i32
  }
  func.func @transform_1(%arg0: i32, %arg1: i32) -> (i32, i32) {
    %c0_i32 = arith.constant 0 : i32
    %c0_i32_0 = arith.constant 0 : i32
    %c0_i32_1 = arith.constant 0 : i32
    return %c0_i32, %c0_i32_0 : i32, i32
  }
  func.func @transform_2(%arg0: i32, %arg1: i32) -> (i32, i32) {
    %c0_i32 = arith.constant 0 : i32
    %c0_i32_0 = arith.constant 0 : i32
    %c0_i32_1 = arith.constant 0 : i32
    return %c0_i32, %c0_i32_0 : i32, i32
  }
  func.func @transform_3(%arg0: i32, %arg1: i32) -> (i32, i32, i32) {
    %c0_i32 = arith.constant 0 : i32
    %c0_i32_0 = arith.constant 0 : i32
    return %arg0, %c0_i32, %arg1 : i32, i32, i32
  }
  func.func @transform_4(%arg0: i32, %arg1: i32) -> (i32, i32, i32, i32) {
    %c0_i32 = arith.constant 0 : i32
    %c0_i32_0 = arith.constant 0 : i32
    %c0_i32_1 = arith.constant 0 : i32
    return %arg0, %arg1, %c0_i32, %c0_i32_0 : i32, i32, i32, i32
  }
}

module attributes {stable_mosaic.version = 11 : i64} {
  func.func @_bn_relu_kernel(%arg0: i32, %arg1: i32, %arg2: memref<1x8x512xf32, #tpu.memory_space<vmem>>, %arg3: memref<8x1xf32, #tpu.memory_space<vmem>>, %arg4: memref<8x1xf32, #tpu.memory_space<vmem>>, %arg5: memref<1x8x512xf32, #tpu.memory_space<vmem>>) attributes {dimension_semantics = [#tpu.dimension_semantics<parallel>, #tpu.dimension_semantics<parallel>], iteration_bounds = array<i64: 2, 2>, scalar_prefetch = 0 : i64, scratch_operands = 0 : i64, tpu.core_type = #tpu.core_type<tc>, window_params = [{transform_indices = @transform_0, window_bounds = array<i64: 1, 8, 512>}, {pipeline_mode = #tpu.pipeline_mode<synchronous>, transform_indices = @transform_1, window_bounds = array<i64: 8, 1>}, {pipeline_mode = #tpu.pipeline_mode<synchronous>, transform_indices = @transform_2, window_bounds = array<i64: 8, 1>}, {transform_indices = @transform_3, window_bounds = array<i64: 1, 8, 512>}]} {
    %c0 = arith.constant 0 : index
    %c0_0 = arith.constant 0 : index
    %c0_1 = arith.constant 0 : index
    %0 = vector.load %arg2[%c0, %c0_0, %c0_1] : memref<1x8x512xf32, #tpu.memory_space<vmem>>, vector<1x8x512xf32>
    %1 = vector.shape_cast %0 : vector<1x8x512xf32> to vector<8x512xf32>
    %c0_2 = arith.constant 0 : index
    %c0_3 = arith.constant 0 : index
    %2 = vector.load %arg3[%c0_2, %c0_3] : memref<8x1xf32, #tpu.memory_space<vmem>>, vector<8x1xf32>
    %3 = vector.broadcast %2 : vector<8x1xf32> to vector<8x512xf32>
    %4 = arith.mulf %1, %3 : vector<8x512xf32>
    %c0_4 = arith.constant 0 : index
    %c0_5 = arith.constant 0 : index
    %5 = vector.load %arg4[%c0_4, %c0_5] : memref<8x1xf32, #tpu.memory_space<vmem>>, vector<8x1xf32>
    %6 = vector.broadcast %5 : vector<8x1xf32> to vector<8x512xf32>
    %7 = arith.addf %4, %6 : vector<8x512xf32>
    %cst = arith.constant 0.000000e+00 : f32
    %8 = vector.broadcast %cst : f32 to vector<8x512xf32>
    %9 = arith.maximumf %7, %8 : vector<8x512xf32>
    %c0_6 = arith.constant 0 : index
    %c0_7 = arith.constant 0 : index
    %c0_8 = arith.constant 0 : index
    %10 = vector.load %arg5[%c0_6, %c0_7, %c0_8] : memref<1x8x512xf32, #tpu.memory_space<vmem>>, vector<1x8x512xf32>
    %11 = vector.shape_cast %10 : vector<1x8x512xf32> to vector<8x512xf32>
    %12 = vector.shape_cast %9 : vector<8x512xf32> to vector<1x8x512xf32>
    tpu.vector_store %arg5[%c0_6, %c0_7, %c0_8], %12 {strides = array<i32>} : memref<1x8x512xf32, #tpu.memory_space<vmem>>, vector<1x8x512xf32>,
    return
  }
  func.func @transform_0(%arg0: i32, %arg1: i32) -> (i32, i32, i32) {
    %c0_i32 = arith.constant 0 : i32
    %c0_i32_0 = arith.constant 0 : i32
    return %arg0, %c0_i32, %arg1 : i32, i32, i32
  }
  func.func @transform_1(%arg0: i32, %arg1: i32) -> (i32, i32) {
    %c0_i32 = arith.constant 0 : i32
    %c0_i32_0 = arith.constant 0 : i32
    %c0_i32_1 = arith.constant 0 : i32
    return %c0_i32, %c0_i32_0 : i32, i32
  }
  func.func @transform_2(%arg0: i32, %arg1: i32) -> (i32, i32) {
    %c0_i32 = arith.constant 0 : i32
    %c0_i32_0 = arith.constant 0 : i32
    %c0_i32_1 = arith.constant 0 : i32
    return %c0_i32, %c0_i32_0 : i32, i32
  }
  func.func @transform_3(%arg0: i32, %arg1: i32) -> (i32, i32, i32) {
    %c0_i32 = arith.constant 0 : i32
    %c0_i32_0 = arith.constant 0 : i32
    return %arg0, %c0_i32, %arg1 : i32, i32, i32
  }
}

</mosaic_0001>

<llo_original>
// kernel: deconv_layer_forward.2
$region0: #{deconv_layer_forward.2}
  #allocation0 [shape = 'u32[]', space=smem, size = 0x4, offset = 0x4, fixed_abs, tag = 'smem constant byte address 0x4 - core index']
  #allocation1 [shape = 'u32[144,128]{1,0:T(1,128)}', space=vmem, size = 0x12000, scoped, tag = 'internal scratch']
  %s0 = inlined_call_operand.vmem [shape: bf16[2,36,1024], index: 0, kind: input, shape index: {}]
  %s1 = inlined_call_operand.vmem [shape: bf16[8,36], index: 1, kind: input, shape index: {}]
  %s2 = inlined_call_operand.vmem [shape: f32[8,1], index: 2, kind: input, shape index: {}]
  %s3 = inlined_call_operand.vmem [shape: f32[2,8,1024], index: 3, kind: output, shape index: {0}]
  %s4 = inlined_call_operand.vmem [shape: f32[2,2,8,2], index: 4, kind: output, shape index: {1}]
  %5 = xla_tuple %s3, %s4
  %s6 = sld [smem:[#allocation0]]
  $region76: #{deconv_layer_forward.2} parent=0
    _
  %s8 = ssub.s32 1, %s6
  %s9 = scalar_select 0, %s8, %s6
  $region1: #{deconv_layer_forward.2} parent=0
    #allocation2 [shape = 'u8[81920]{0}', space=vmem, size = 0x14000, scoped, tag = 'input window, operand 0']
    loop: start=0, step=1, limit=6
    $region2: #{deconv_layer_forward.2} parent=1 // loop_pre_header
      _
    $region3: #{deconv_layer_forward.2} parent=1 // loop_header
      %s11 = sphi 0, %s15
      %p12 = scmp.ge.s32.totalorder %s11, 6
      %s18 = sphi 0, %s30
      %s19 = sphi 0, %s26
      %s20 = sphi 0, %s18
      %s21 = sphi 0, %s19
      %s22 = sphi 0, %s20
      %s23 = sphi 0, %s21
      %s35 = sphi 0, %s37
      %s38 = sphi 0, %s35
      %s39 = sphi 0, %s38
      %s55 = sphi 0, %s39
      %s59 = sphi 0, %s59
      %s61 = sphi 0, %s59
      %s62 = sphi 0, %s61
      %s76 = sphi 0, %s62
      %s80 = sphi 0, %s80
      %s82 = sphi 0, %s80
      %s83 = sphi 0, %s82
      %s97 = sphi 0, %s83
      %s105 = sphi 0, %s107
      %s108 = sphi 0, %s105
      %s109 = sphi 0, %s108
      %s125 = sphi 0, %s109
      %s133 = sphi 0, %s135
      %s136 = sphi 0, %s133
      %s137 = sphi 0, %s136
      %s153 = sphi 0, %s137
    $region4: #{deconv_layer_forward.2} parent=1 // loop_header_branch
      %14 = sbr.rel (%p12) target = $region8
    $region5: #{deconv_layer_forward.2} parent=1 // loop_body
      %s16 = ssub.s32 %s11, 1
      %s17 = ssub.s32 %s11, 2
      %s24 = sadd.s32 1, %s19
      %p25 = scmp.ge.s32.totalorder %s24, 2
      %s26 = scalar_select %p25, 0, %s24
      %s27 = sadd.s32 1, %s18
      %s28 = scalar_select %p25, %s27, %s18
      %p29 = scmp.ge.s32.totalorder %s28, 2
      %s30 = scalar_select %p29, 0, %s28
      %s31 = ssub.s32 %s18, %s30
      %s32 = ssub.s32 %s19, %s26
      %s33 = sor.u32 %s31, %s32
      %p34 = scmp.eq.s32.totalorder %s33, 0
      %s36 = sadd.s32 %s35, 1
      %s37 = scalar_select %p34, %s35, %s36
      %p40 = pneg %p34
      %p41 = scmp.eq.s32.totalorder %s11, 3
      %p42 = por %p40, %p41
      %p43 = scmp.ne.s32.totalorder %s35, %s38
      %p44 = scmp.eq.s32.totalorder %s11, 0
      %p45 = por %p43, %p44
      %p46 = scmp.ne.s32.totalorder %s35, %s38
      %p47 = scmp.eq.s32.totalorder %s16, 3
      %p48 = por %p46, %p47
      %p49 = scmp.ne.s32.totalorder %s38, %s39
      %p50 = scmp.eq.s32.totalorder %s16, 0
      %p51 = por %p49, %p50
      %p52 = scmp.ne.s32.totalorder %s38, %s39
      %p53 = scmp.eq.s32.totalorder %s17, 3
      %p54 = por %p52, %p53
      %p56 = scmp.ne.s32.totalorder %s39, %s55
      %p57 = scmp.eq.s32.totalorder %s17, 0
      %p58 = por %p56, %p57
      %s60 = sadd.s32 %s59, 1
      %p63 = scmp.eq.s32.totalorder %s11, 3
      %p64 = scmp.ne.s32.totalorder %s59, %s61
      %p65 = scmp.eq.s32.totalorder %s11, 0
      %p66 = por %p64, %p65
      %p67 = scmp.ne.s32.totalorder %s59, %s61
      %p68 = scmp.eq.s32.totalorder %s16, 3
      %p69 = por %p67, %p68
      %p70 = scmp.ne.s32.totalorder %s61, %s62
      %p71 = scmp.eq.s32.totalorder %s16, 0
      %p72 = por %p70, %p71
      %p73 = scmp.ne.s32.totalorder %s61, %s62
      %p74 = scmp.eq.s32.totalorder %s17, 3
      %p75 = por %p73, %p74
      %p77 = scmp.ne.s32.totalorder %s62, %s76
      %p78 = scmp.eq.s32.totalorder %s17, 0
      %p79 = por %p77, %p78
      %s81 = sadd.s32 %s80, 1
      %p84 = scmp.eq.s32.totalorder %s11, 3
      %p85 = scmp.ne.s32.totalorder %s80, %s82
      %p86 = scmp.eq.s32.totalorder %s11, 0
      %p87 = por %p85, %p86
      %p88 = scmp.ne.s32.totalorder %s80, %s82
      %p89 = scmp.eq.s32.totalorder %s16, 3
      %p90 = por %p88, %p89
      %p91 = scmp.ne.s32.totalorder %s82, %s83
      %p92 = scmp.eq.s32.totalorder %s16, 0
      %p93 = por %p91, %p92
      %p94 = scmp.ne.s32.totalorder %s82, %s83
      %p95 = scmp.eq.s32.totalorder %s17, 3
      %p96 = por %p94, %p95
      %p98 = scmp.ne.s32.totalorder %s83, %s97
      %p99 = scmp.eq.s32.totalorder %s17, 0
      %p100 = por %p98, %p99
      %s101 = ssub.s32 %s18, %s30
      %s102 = ssub.s32 %s19, %s26
      %s103 = sor.u32 %s101, %s102
      %p104 = scmp.eq.s32.totalorder %s103, 0
      %s106 = sadd.s32 %s105, 1
      %s107 = scalar_select %p104, %s105, %s106
      %p110 = pneg %p104
      %p111 = scmp.eq.s32.totalorder %s11, 3
      %p112 = por %p110, %p111
      %p113 = scmp.ne.s32.totalorder %s105, %s108
      %p114 = scmp.eq.s32.totalorder %s11, 0
      %p115 = por %p113, %p114
      %p116 = scmp.ne.s32.totalorder %s105, %s108
      %p117 = scmp.eq.s32.totalorder %s16, 3
      %p118 = por %p116, %p117
      %p119 = scmp.ne.s32.totalorder %s108, %s109
      %p120 = scmp.eq.s32.totalorder %s16, 0
      %p121 = por %p119, %p120
      %p122 = scmp.ne.s32.totalorder %s108, %s109
      %p123 = scmp.eq.s32.totalorder %s17, 3
      %p124 = por %p122, %p123
      %p126 = scmp.ne.s32.totalorder %s109, %s125
      %p127 = scmp.eq.s32.totalorder %s17, 0
      %p128 = por %p126, %p127
      %s129 = ssub.s32 %s18, %s30
      %s130 = ssub.s32 %s19, %s26
      %s131 = sor.u32 %s129, %s130
      %p132 = scmp.eq.s32.totalorder %s131, 0
      %s134 = sadd.s32 %s133, 1
      %s135 = scalar_select %p132, %s133, %s134
      %p138 = pneg %p132
      %p139 = scmp.eq.s32.totalorder %s11, 3
      %p140 = por %p138, %p139
      %p141 = scmp.ne.s32.totalorder %s133, %s136
      %p142 = scmp.eq.s32.totalorder %s11, 0
      %p143 = por %p141, %p142
      %p144 = scmp.ne.s32.totalorder %s133, %s136
      %p145 = scmp.eq.s32.totalorder %s16, 3
      %p146 = por %p144, %p145
      %p147 = scmp.ne.s32.totalorder %s136, %s137
      %p148 = scmp.eq.s32.totalorder %s16, 0
      %p149 = por %p147, %p148
      %p150 = scmp.ne.s32.totalorder %s136, %s137
      %p151 = scmp.eq.s32.totalorder %s17, 3
      %p152 = por %p150, %p151
      %p154 = scmp.ne.s32.totalorder %s137, %s153
      %p155 = scmp.eq.s32.totalorder %s17, 0
      %p156 = por %p154, %p155
      %p157 = scmp.le.s32.totalorder 1, %s11
      %p158 = scmp.lt.s32.totalorder %s11, 5
      %p159 = pnand %p157, %p158
      %p160 = pneg %p159
      // Predicated region
      $region9: #{deconv_layer_forward.2} parent=5 // pred_check
        _
      $region10: #{deconv_layer_forward.2} parent=5 // pred_check_branch
        %162 = sbr.rel (%p159) target = $region12
      $region11: #{deconv_layer_forward.2} parent=5 // pred_region
        %s163 = ssub.s32 %s11, 1
        // Predicated region
        $region13: #{deconv_layer_forward.2} parent=11 // pred_check
          %p164 = pneg %p72
        $region14: #{deconv_layer_forward.2} parent=11 // pred_check_branch
          %166 = sbr.rel (%p164) target = $region16
        $region15: #{deconv_layer_forward.2} parent=11 // pred_region
          _
        $region16: #{deconv_layer_forward.2} parent=11 // pred_fallthru
          _
        // Predicated region
        $region17: #{deconv_layer_forward.2} parent=11 // pred_check
          %p167 = pneg %p93
        $region18: #{deconv_layer_forward.2} parent=11 // pred_check_branch
          %169 = sbr.rel (%p167) target = $region20
        $region19: #{deconv_layer_forward.2} parent=11 // pred_region
          _
        $region20: #{deconv_layer_forward.2} parent=11 // pred_fallthru
          _
      $region12: #{deconv_layer_forward.2} parent=5 // pred_fallthru
        _
      %p170 = scmp.lt.s32.totalorder %s11, 4
      // Predicated region
      $region21: #{deconv_layer_forward.2} parent=5 // pred_check
        %p171 = pneg %p170
      $region22: #{deconv_layer_forward.2} parent=5 // pred_check_branch
        %173 = sbr.rel (%p171) target = $region24
      $region23: #{deconv_layer_forward.2} parent=5 // pred_region
        // Predicated region
        $region25: #{deconv_layer_forward.2} parent=23 // pred_check
          %p174 = pneg %p45
        $region26: #{deconv_layer_forward.2} parent=23 // pred_check_branch
          %176 = sbr.rel (%p174) target = $region28
        $region27: #{deconv_layer_forward.2} parent=23 // pred_region
          %s177 = sand.u32 %s35, 1
          %s178 = sand.u32 %s35, 1
          %s179 = smul.addr %s178, 80
          %s180 = scalar_lea.vmem [#allocation2], %s179
          %s181 = smul.u32 4, %s19
          %s182 = smul.addr %s18, 40
          %s183 = sadd.s32 %s181, %s182
          %s184 = smul.addr %s183, 4
          %s185 = scalar_lea.vmem %s0, %s184
          // Predicated region
          $region29: #{deconv_layer_forward.2} parent=27 // pred_check
            _
          $region30: #{deconv_layer_forward.2} parent=27 // pred_check_branch
            %187 = sbr.rel (0) target = $region32
          $region31: #{deconv_layer_forward.2} parent=27 // pred_region
            // Predicated region
            $region33: #{deconv_layer_forward.2} parent=31 // pred_check
              _
            $region34: #{deconv_layer_forward.2} parent=31 // pred_check_branch
              %189 = sbr.rel (0) target = $region36
            $region35: #{deconv_layer_forward.2} parent=31 // pred_region
              loop: start=0, step=1, limit=1
              $region37: #{deconv_layer_forward.2} parent=35 // loop_pre_header
                _
              $region38: #{deconv_layer_forward.2} parent=35 // loop_header
                %s191 = sphi 0, %s195
                %p192 = scmp.ge.s32.totalorder %s191, 1
                %s196 = sphi %s185, %s185
                %s197 = sphi %s180, %s180
              $region39: #{deconv_layer_forward.2} parent=35 // loop_header_branch
                %194 = sbr.rel (%p192) target = $region43
              $region40: #{deconv_layer_forward.2} parent=35 // loop_body
                %v198 = vld [vmem:[%s196] sm:$0xff]
                %199 = vst [vmem:[%s197] sm:$0xff] %v198
                %v200 = vld [vmem:[%s196 + $0x8] sm:$0xff]
                %201 = vst [vmem:[%s197 + $0x8] sm:$0xff] %v200
                %v202 = vld [vmem:[%s196 + $0x20] sm:$0xff]
                %203 = vst [vmem:[%s197 + $0x10] sm:$0xff] %v202
                %v204 = vld [vmem:[%s196 + $0x28] sm:$0xff]
                %205 = vst [vmem:[%s197 + $0x18] sm:$0xff] %v204
                %v206 = vld [vmem:[%s196 + $0x40] sm:$0xff]
                %207 = vst [vmem:[%s197 + $0x20] sm:$0xff] %v206
                %v208 = vld [vmem:[%s196 + $0x48] sm:$0xff]
                %209 = vst [vmem:[%s197 + $0x28] sm:$0xff] %v208
                %v210 = vld [vmem:[%s196 + $0x60] sm:$0xff]
                %211 = vst [vmem:[%s197 + $0x30] sm:$0xff] %v210
                %v212 = vld [vmem:[%s196 + $0x68] sm:$0xff]
                %213 = vst [vmem:[%s197 + $0x38] sm:$0xff] %v212
                %v214 = vld [vmem:[%s196 + $0x80] sm:$0xff]
                %215 = vst [vmem:[%s197 + $0x40] sm:$0xff] %v214
                %v216 = vld [vmem:[%s196 + $0x88] sm:$0xff]
                %217 = vst [vmem:[%s197 + $0x48] sm:$0xff] %v216
              $region41: #{deconv_layer_forward.2} parent=35 // loop_footer
                %s195 = sadd.s32 1, %s191
              $region42: #{deconv_layer_forward.2} parent=35 // loop_footer_branch
                %190 = sbr.rel target = $region38
              $region43: #{deconv_layer_forward.2} parent=35 // loop_exit
                _
            $region36: #{deconv_layer_forward.2} parent=31 // pred_fallthru
              _
            // Predicated region
            $region44: #{deconv_layer_forward.2} parent=31 // pred_check
              _
            $region45: #{deconv_layer_forward.2} parent=31 // pred_check_branch
              %219 = sbr.rel target = $region47
            $region46: #{deconv_layer_forward.2} parent=31 // pred_region
              _
            $region47: #{deconv_layer_forward.2} parent=31 // pred_fallthru
              _
          $region32: #{deconv_layer_forward.2} parent=27 // pred_fallthru
            _
          %220 = vnop
        $region28: #{deconv_layer_forward.2} parent=23 // pred_fallthru
          _
      $region24: #{deconv_layer_forward.2} parent=5 // pred_fallthru
        _
      %p221 = scmp.le.s32.totalorder 1, %s11
      %p222 = scmp.lt.s32.totalorder %s11, 5
      %p223 = pnand %p221, %p222
      %p224 = pneg %p223
      // Predicated region
      $region48: #{deconv_layer_forward.2} parent=5 // pred_check
        _
      $region49: #{deconv_layer_forward.2} parent=5 // pred_check_branch
        %226 = sbr.rel (%p223) target = $region51
      $region50: #{deconv_layer_forward.2} parent=5 // pred_region
        %s227 = ssub.s32 %s11, 1
        %s228 = sand.u32 %s38, 1
        %s229 = sand.u32 %s38, 1
        %s230 = smul.addr %s229, 80
        %s231 = scalar_lea.vmem [#allocation2], %s230
        // Predicated region
        $region52: #{deconv_layer_forward.2} parent=50 // pred_check
          %p232 = pneg %p51
        $region53: #{deconv_layer_forward.2} parent=50 // pred_check_branch
          %234 = sbr.rel (%p232) target = $region55
        $region54: #{deconv_layer_forward.2} parent=50 // pred_region
          _
        $region55: #{deconv_layer_forward.2} parent=50 // pred_fallthru
          _
        %s235 = sand.u32 %s38, 1
        %s236 = sand.u32 %s38, 1
        %s237 = smul.addr %s236, 80
        %s238 = scalar_lea.vmem [#allocation2], %s237
        %p239 = pneg %p51
        %p240 = pneg %p48
        %p241 = pneg %p72
        %p242 = pneg %p69
        %p243 = pneg %p93
        %p244 = pneg %p90
        %p245 = pneg %p121
        %p246 = pneg %p118
        %s247 = smul.u32 4, %s21
        %p248 = scmp.lt.s32.totalorder %s20, 1
        %s249 = scalar_select %p248, %s20, 1
        %p250 = scmp.lt.s32.totalorder %s247, 7
        %s251 = scalar_select %p250, %s247, 7
        %s252 = smul.addr %s249, 8
        %s253 = sadd.s32 %s251, %s252
        %s254 = smul.addr %s253, 8
        %s255 = scalar_lea.vmem %s3, %s254
        %p256 = pneg %p149
        %p257 = pneg %p146
        %p258 = scmp.lt.s32.totalorder %s20, 1
        %s259 = scalar_select %p258, %s20, 1
        %p260 = scmp.lt.s32.totalorder %s21, 1
        %s261 = scalar_select %p260, %s21, 1
        %s262 = smul.addr %s259, 2
        %s263 = sadd.s32 %s261, %s262
        %s264 = smul.addr %s263, 8
        %s265 = scalar_lea.vmem %s4, %s264
        %s266 = smul.u32 4, %s21
        %s267 = smul.u32 4, %s21
        %p268 = scmp.lt.s32.totalorder %s20, 1
        %s269 = scalar_select %p268, %s20, 1
        %p270 = scmp.lt.s32.totalorder %s267, 7
        %s271 = scalar_select %p270, %s267, 7
        %s272 = smul.addr %s269, 8
        %s273 = sadd.s32 %s271, %s272
        %s274 = smul.addr %s273, 8
        %s275 = scalar_lea.vmem %s3, %s274
        %s276 = smul.u32 4, %s21
        %p277 = scmp.lt.s32.totalorder %s20, 1
        %s278 = scalar_select %p277, %s20, 1
        %p279 = scmp.lt.s32.totalorder %s21, 1
        %s280 = scalar_select %p279, %s21, 1
        %s281 = smul.addr %s278, 2
        %s282 = sadd.s32 %s280, %s281
        %s283 = smul.addr %s282, 8
        %s284 = scalar_lea.vmem %s4, %s283
        %v286 = vld [vmem:[%s1] sm:$0xf]
        %v287 = vld [vmem:[%s231] sm:$0xff]
        %v288 = vld [vmem:[%s231 + $0x8] sm:$0xff]
        %v289 = vld [vmem:[%s231 + $0x10] sm:$0xff]
        %v290 = vld [vmem:[%s231 + $0x18] sm:$0xff]
        %v291 = vld [vmem:[%s231 + $0x20] sm:$0xff]
        %v292 = vld [vmem:[%s231 + $0x28] sm:$0xff]
        %v293 = vld [vmem:[%s231 + $0x30] sm:$0xff]
        %v294 = vld [vmem:[%s231 + $0x38] sm:$0xff]
        %v295 = vld [vmem:[%s231 + $0x40] sm:$0x33]
        %v296 = vld [vmem:[%s231 + $0x48] sm:$0x33]
        %v297 = vld [vmem:[%s2] sm:$0xff]
        %299 = vset.pattern.permute.xlu0 0
        %300 = vperm.xlu0 %299, %v297
        %v301 = vpop.permute.xlu0 %300
        %v313 = vunpack.c.l.b16 %v287
        %v314 = vunpack.c.h.b16 %v287
        %v315 = vunpack.c.l.b16 %v288
        %v316 = vunpack.c.h.b16 %v288
        %v317 = vunpack.c.l.b16 %v289
        %v318 = vunpack.c.h.b16 %v289
        %v319 = vunpack.c.l.b16 %v290
        %v320 = vunpack.c.h.b16 %v290
        %v321 = vunpack.c.l.b16 %v291
        %v322 = vunpack.c.h.b16 %v291
        %v323 = vunpack.c.l.b16 %v292
        %v324 = vunpack.c.h.b16 %v292
        %v325 = vunpack.c.l.b16 %v293
        %v326 = vunpack.c.h.b16 %v293
        %v327 = vunpack.c.l.b16 %v294
        %v328 = vunpack.c.h.b16 %v294
        %v329 = vunpack.c.l.b16 %v295
        %v330 = vunpack.c.h.b16 %v295
        %v331 = vunpack.c.l.b16 %v296
        %v332 = vunpack.c.h.b16 %v296
        %v333 = vpack.c.b16 %v317, %v313
        %v334 = vpack.c.b16 %v318, %v314
        %v335 = vpack.c.b16 %v319, %v315
        %v336 = vpack.c.b16 %v320, %v316
        %v337 = vpack.c.b16 %v325, %v321
        %v338 = vpack.c.b16 %v326, %v322
        %v339 = vpack.c.b16 %v327, %v323
        %v340 = vpack.c.b16 %v328, %v324
        %v341 = vpack.c.b16 %v329, %v329
        %v342 = vpack.c.b16 %v330, %v330
        %v343 = vpack.c.b16 %v331, %v331
        %v344 = vpack.c.b16 %v332, %v332
        %vm353 = vcmask 293888
        %v355 = vsel %vm353, %v286, 0
        %vm357 = vcmask 1041408
        %v359 = vsel %vm357, %v341, 0
        %v362 = vsel %vm357, %v342, 0
        %v365 = vsel %vm357, %v343, 0
        %v368 = vsel %vm357, %v344, 0
        %370 = vmatprep.subr.bf16.mxu0 0
        %371 = vmatpush1.bf16.msra.mxu0 0
        %372 = vmatprep.subr.bf16.mxu0 0
        %373 = vmatpush1.bf16.msra.mxu0 0
        %374 = vmatprep.subr.bf16.mxu0 0
        %375 = vmatpush1.bf16.msra.mxu0 0
        %376 = vmatprep.subr.bf16.mxu0 0
        %377 = vmatpush1.bf16.msra.mxu0 0
        %378 = vmatprep.subr.bf16.mxu0 0
        %379 = vmatpush1.bf16.msra.mxu0 0
        %380 = vmatprep.subr.bf16.mxu0 %v362
        %381 = vmatpush1.bf16.msra.mxu0 %v359
        %382 = vmatprep.subr.bf16.mxu0 %v338
        %383 = vmatpush1.bf16.msra.mxu0 %v337
        %384 = vmatprep.subr.bf16.mxu0 %v334
        %385 = vmatpush1.bf16.msra.mxu0 %v333
        %386 = vmatprep.subr.bf16.mxu0 0
        %387 = vmatpush2.bf16.msra.mxu0 0
        %388 = vmatprep.subr.bf16.mxu0 0
        %389 = vmatpush2.bf16.msra.mxu0 0
        %390 = vmatprep.subr.bf16.mxu0 0
        %391 = vmatpush2.bf16.msra.mxu0 0
        %392 = vmatprep.subr.bf16.mxu0 0
        %393 = vmatpush2.bf16.msra.mxu0 0
        %394 = vmatprep.subr.bf16.mxu0 0
        %395 = vmatpush2.bf16.msra.mxu0 0
        %396 = vmatprep.subr.bf16.mxu0 0
        %397 = vmatpush2.bf16.msra.mxu0 0
        %398 = vmatprep.subr.bf16.mxu0 0
        %399 = vmatpush2.bf16.msra.mxu0 0
        %400 = vmatprep.subr.bf16.mxu0 0
        %401 = vmatpush2.bf16.msra.mxu0 0
        %402 = vmatprep.mubr.bf16.mxu0 0
        %403 = vmatmul.mubr.bf16.gmra.mxu0 %v355
        %v404 = vpop.f32.mrf.mxu0
        %v405 = vadd.f32 %v301, %v404
        %v406 = vpop.f32.mrf.mxu0
        %v407 = vadd.f32 %v301, %v406
        %v408 = vpop.f32.mrf.mxu0
        %v409 = vpop.f32.mrf.mxu0
        %410 = vdwg.mxu0
        %411 = vmatprep.subr.bf16.mxu0 0
        %412 = vmatpush1.bf16.msra.mxu0 0
        %413 = vmatprep.subr.bf16.mxu0 0
        %414 = vmatpush1.bf16.msra.mxu0 0
        %415 = vmatprep.subr.bf16.mxu0 0
        %416 = vmatpush1.bf16.msra.mxu0 0
        %417 = vmatprep.subr.bf16.mxu0 0
        %418 = vmatpush1.bf16.msra.mxu0 0
        %419 = vmatprep.subr.bf16.mxu0 0
        %420 = vmatpush1.bf16.msra.mxu0 0
        %421 = vmatprep.subr.bf16.mxu0 %v368
        %422 = vmatpush1.bf16.msra.mxu0 %v365
        %423 = vmatprep.subr.bf16.mxu0 %v340
        %424 = vmatpush1.bf16.msra.mxu0 %v339
        %425 = vmatprep.subr.bf16.mxu0 %v336
        %426 = vmatpush1.bf16.msra.mxu0 %v335
        %427 = vmatprep.subr.bf16.mxu0 0
        %428 = vmatpush2.bf16.msra.mxu0 0
        %429 = vmatprep.subr.bf16.mxu0 0
        %430 = vmatpush2.bf16.msra.mxu0 0
        %431 = vmatprep.subr.bf16.mxu0 0
        %432 = vmatpush2.bf16.msra.mxu0 0
        %433 = vmatprep.subr.bf16.mxu0 0
        %434 = vmatpush2.bf16.msra.mxu0 0
        %435 = vmatprep.subr.bf16.mxu0 0
        %436 = vmatpush2.bf16.msra.mxu0 0
        %437 = vmatprep.subr.bf16.mxu0 0
        %438 = vmatpush2.bf16.msra.mxu0 0
        %439 = vmatprep.subr.bf16.mxu0 0
        %440 = vmatpush2.bf16.msra.mxu0 0
        %441 = vmatprep.subr.bf16.mxu0 0
        %442 = vmatpush2.bf16.msra.mxu0 0
        %443 = vmatprep.mubr.bf16.mxu0 0
        %444 = vmatmul.mubr.bf16.gmra.mxu0 %v355
        %v445 = vpop.f32.mrf.mxu0
        %v446 = vadd.f32 %v301, %v445
        %v447 = vpop.f32.mrf.mxu0
        %v448 = vadd.f32 %v301, %v447
        %v449 = vpop.f32.mrf.mxu0
        %v450 = vpop.f32.mrf.mxu0
        %451 = vdwg.mxu0
        %452 = vst [vmem:[%s275] sm:$0xff] %v405
        %453 = vst [vmem:[%s275 + $0x8] sm:$0xff] %v407
        %454 = vst [vmem:[%s275 + $0x10] sm:$0xff] %v446
        %455 = vst [vmem:[%s275 + $0x18] sm:$0xff] %v448
        %v456 = vlaneseq
        %v457 = vand.u32 %v456, 127
        %v458 = vadd.s32 %v457, 128
        %v459 = vadd.s32 %v457, 256
        %v460 = vadd.s32 %v457, 384
        %s461 = smul.u32 %s21, 512
        %v462 = vstv %s461
        %v463 = vadd.s32 %v457, %v462
        %v464 = vadd.s32 %v458, %v462
        %v465 = vadd.s32 %v459, %v462
        %v466 = vadd.s32 %v460, %v462
        %vm467 = vcmp.lt.s32.totalorder %v463, 1024
        %vm468 = vcmp.lt.s32.totalorder %v464, 1024
        %vm469 = vcmp.lt.s32.totalorder %v465, 1024
        %vm470 = vcmp.lt.s32.totalorder %v466, 1024
        %v471 = vsel %vm467, 1, 0
        %v472 = vsel %vm468, 1, 0
        %v473 = vsel %vm469, 1, 0
        %v474 = vsel %vm470, 1, 0
        %v475 = vcvt.s32.f32 %v471
        %v476 = vcvt.s32.f32 %v472
        %v477 = vcvt.s32.f32 %v473
        %v478 = vcvt.s32.f32 %v474
        %v479 = vmul.f32 %v405, %v475
        %v480 = vmul.f32 %v407, %v476
        %v481 = vmul.f32 %v446, %v477
        %v482 = vmul.f32 %v448, %v478
        %v483 = vadd.f32 %v479, %v480
        %v484 = vadd.f32 %v483, %v481
        %v485 = vadd.f32 %v484, %v482
        %486 = vadd.xlane.f32.xlu0 %v485
        %v487 = vpop.xlane.xlu0 %486
        %vm488 = vcmask 7168
        %489 = vst.msk [vmem:[%s284] sm:$0xff] %vm488, %v487
        %v490 = vmul.f32 %v479, %v405
        %v491 = vmul.f32 %v480, %v407
        %v492 = vmul.f32 %v481, %v446
        %v493 = vmul.f32 %v482, %v448
        %v494 = vadd.f32 %v490, %v491
        %v495 = vadd.f32 %v494, %v492
        %v496 = vadd.f32 %v495, %v493
        %497 = vadd.xlane.f32.xlu0 %v496
        %v498 = vpop.xlane.xlu0 %497
        %vm499 = vcmask 15368
        %500 = vst.msk [vmem:[%s284] sm:$0xff] %vm499, %v498
        %s501 = smul.u32 4, %s21
        %p502 = scmp.lt.s32.totalorder %s20, 1
        %s503 = scalar_select %p502, %s20, 1
        %p504 = scmp.lt.s32.totalorder %s501, 7
        %s505 = scalar_select %p504, %s501, 7
        %s506 = smul.addr %s503, 8
        %s507 = sadd.s32 %s505, %s506
        %s508 = smul.addr %s507, 8
        %s509 = scalar_lea.vmem %s3, %s508
        %p510 = scmp.lt.s32.totalorder %s20, 1
        %s511 = scalar_select %p510, %s20, 1
        %p512 = scmp.lt.s32.totalorder %s21, 1
        %s513 = scalar_select %p512, %s21, 1
        %s514 = smul.addr %s511, 2
        %s515 = sadd.s32 %s513, %s514
        %s516 = smul.addr %s515, 8
        %s517 = scalar_lea.vmem %s4, %s516
        // Predicated region
        $region56: #{deconv_layer_forward.2} parent=50 // pred_check
          %p518 = pneg %p118
        $region57: #{deconv_layer_forward.2} parent=50 // pred_check_branch
          %520 = sbr.rel (%p518) target = $region59
        $region58: #{deconv_layer_forward.2} parent=50 // pred_region
          %s521 = smul.u32 4, %s21
        $region59: #{deconv_layer_forward.2} parent=50 // pred_fallthru
          _
        // Predicated region
        $region60: #{deconv_layer_forward.2} parent=50 // pred_check
          %p522 = pneg %p146
        $region61: #{deconv_layer_forward.2} parent=50 // pred_check_branch
          %524 = sbr.rel (%p522) target = $region63
        $region62: #{deconv_layer_forward.2} parent=50 // pred_region
          _
        $region63: #{deconv_layer_forward.2} parent=50 // pred_fallthru
          _
      $region51: #{deconv_layer_forward.2} parent=5 // pred_fallthru
        _
      %p525 = scmp.le.s32.totalorder 2, %s11
      // Predicated region
      $region64: #{deconv_layer_forward.2} parent=5 // pred_check
        %p526 = pneg %p525
      $region65: #{deconv_layer_forward.2} parent=5 // pred_check_branch
        %528 = sbr.rel (%p526) target = $region67
      $region66: #{deconv_layer_forward.2} parent=5 // pred_region
        %s529 = ssub.s32 %s11, 2
        // Predicated region
        $region68: #{deconv_layer_forward.2} parent=66 // pred_check
          %p530 = pneg %p124
        $region69: #{deconv_layer_forward.2} parent=66 // pred_check_branch
          %532 = sbr.rel (%p530) target = $region71
        $region70: #{deconv_layer_forward.2} parent=66 // pred_region
          %s533 = smul.u32 4, %s23
          %p534 = scmp.lt.s32.totalorder %s22, 1
          %s535 = scalar_select %p534, %s22, 1
          %p536 = scmp.lt.s32.totalorder %s533, 7
          %s537 = scalar_select %p536, %s533, 7
          %s538 = smul.addr %s535, 8
          %s539 = sadd.s32 %s537, %s538
          %s540 = smul.addr %s539, 8
          %s541 = scalar_lea.vmem %s3, %s540
        $region71: #{deconv_layer_forward.2} parent=66 // pred_fallthru
          _
        // Predicated region
        $region72: #{deconv_layer_forward.2} parent=66 // pred_check
          %p542 = pneg %p152
        $region73: #{deconv_layer_forward.2} parent=66 // pred_check_branch
          %544 = sbr.rel (%p542) target = $region75
        $region74: #{deconv_layer_forward.2} parent=66 // pred_region
          %p545 = scmp.lt.s32.totalorder %s22, 1
          %s546 = scalar_select %p545, %s22, 1
          %p547 = scmp.lt.s32.totalorder %s23, 1
          %s548 = scalar_select %p547, %s23, 1
          %s549 = smul.addr %s546, 2
          %s550 = sadd.s32 %s548, %s549
          %s551 = smul.addr %s550, 8
          %s552 = scalar_lea.vmem %s4, %s551
        $region75: #{deconv_layer_forward.2} parent=66 // pred_fallthru
          _
      $region67: #{deconv_layer_forward.2} parent=5 // pred_fallthru
        _
    $region6: #{deconv_layer_forward.2} parent=1 // loop_footer
      %s15 = sadd.s32 1, %s11
    $region7: #{deconv_layer_forward.2} parent=1 // loop_footer_branch
      %10 = sbr.rel target = $region3
    $region8: #{deconv_layer_forward.2} parent=1 // loop_exit
      _

// kernel: deconv_layer_forward.3
$region0: #{deconv_layer_forward.3}
  #allocation0 [shape = 'u32[]', space=smem, size = 0x4, offset = 0x4, fixed_abs, tag = 'smem constant byte address 0x4 - core index']
  #allocation1 [shape = 'u32[144,128]{1,0:T(1,128)}', space=vmem, size = 0x12000, scoped, tag = 'internal scratch']
  %s0 = inlined_call_operand.vmem [shape: f32[2,8,1024], index: 0, kind: input, shape index: {}]
  %s1 = inlined_call_operand.vmem [shape: f32[8,1], index: 1, kind: input, shape index: {}]
  %s2 = inlined_call_operand.vmem [shape: f32[8,1], index: 2, kind: input, shape index: {}]
  %s3 = inlined_call_operand.vmem [shape: f32[2,8,1024], index: 3, kind: output, shape index: {}]
  %s4 = sld [smem:[#allocation0]]
  $region45: #{deconv_layer_forward.3} parent=0
    _
  %s6 = ssub.s32 1, %s4
  %s7 = scalar_select 0, %s6, %s4
  loop: start=0, step=1, limit=6
  $region2: #{deconv_layer_forward.3} parent=0 // loop_pre_header
    _
  $region3: #{deconv_layer_forward.3} parent=0 // loop_header
    %s9 = sphi 0, %s13
    %p10 = scmp.ge.s32.totalorder %s9, 6
    %s16 = sphi 0, %s28
    %s17 = sphi 0, %s24
    %s18 = sphi 0, %s16
    %s19 = sphi 0, %s17
    %s20 = sphi 0, %s18
    %s21 = sphi 0, %s19
    %s33 = sphi 0, %s35
    %s36 = sphi 0, %s33
    %s37 = sphi 0, %s36
    %s53 = sphi 0, %s37
    %s57 = sphi 0, %s57
    %s59 = sphi 0, %s57
    %s60 = sphi 0, %s59
    %s74 = sphi 0, %s60
    %s78 = sphi 0, %s78
    %s80 = sphi 0, %s78
    %s81 = sphi 0, %s80
    %s95 = sphi 0, %s81
    %s103 = sphi 0, %s105
    %s106 = sphi 0, %s103
    %s107 = sphi 0, %s106
    %s123 = sphi 0, %s107
  $region4: #{deconv_layer_forward.3} parent=0 // loop_header_branch
    %12 = sbr.rel (%p10) target = $region8
  $region5: #{deconv_layer_forward.3} parent=0 // loop_body
    %s14 = ssub.s32 %s9, 1
    %s15 = ssub.s32 %s9, 2
    %s22 = sadd.s32 1, %s17
    %p23 = scmp.ge.s32.totalorder %s22, 2
    %s24 = scalar_select %p23, 0, %s22
    %s25 = sadd.s32 1, %s16
    %s26 = scalar_select %p23, %s25, %s16
    %p27 = scmp.ge.s32.totalorder %s26, 2
    %s28 = scalar_select %p27, 0, %s26
    %s29 = ssub.s32 %s16, %s28
    %s30 = ssub.s32 %s17, %s24
    %s31 = sor.u32 %s29, %s30
    %p32 = scmp.eq.s32.totalorder %s31, 0
    %s34 = sadd.s32 %s33, 1
    %s35 = scalar_select %p32, %s33, %s34
    %p38 = pneg %p32
    %p39 = scmp.eq.s32.totalorder %s9, 3
    %p40 = por %p38, %p39
    %p41 = scmp.ne.s32.totalorder %s33, %s36
    %p42 = scmp.eq.s32.totalorder %s9, 0
    %p43 = por %p41, %p42
    %p44 = scmp.ne.s32.totalorder %s33, %s36
    %p45 = scmp.eq.s32.totalorder %s14, 3
    %p46 = por %p44, %p45
    %p47 = scmp.ne.s32.totalorder %s36, %s37
    %p48 = scmp.eq.s32.totalorder %s14, 0
    %p49 = por %p47, %p48
    %p50 = scmp.ne.s32.totalorder %s36, %s37
    %p51 = scmp.eq.s32.totalorder %s15, 3
    %p52 = por %p50, %p51
    %p54 = scmp.ne.s32.totalorder %s37, %s53
    %p55 = scmp.eq.s32.totalorder %s15, 0
    %p56 = por %p54, %p55
    %s58 = sadd.s32 %s57, 1
    %p61 = scmp.eq.s32.totalorder %s9, 3
    %p62 = scmp.ne.s32.totalorder %s57, %s59
    %p63 = scmp.eq.s32.totalorder %s9, 0
    %p64 = por %p62, %p63
    %p65 = scmp.ne.s32.totalorder %s57, %s59
    %p66 = scmp.eq.s32.totalorder %s14, 3
    %p67 = por %p65, %p66
    %p68 = scmp.ne.s32.totalorder %s59, %s60
    %p69 = scmp.eq.s32.totalorder %s14, 0
    %p70 = por %p68, %p69
    %p71 = scmp.ne.s32.totalorder %s59, %s60
    %p72 = scmp.eq.s32.totalorder %s15, 3
    %p73 = por %p71, %p72
    %p75 = scmp.ne.s32.totalorder %s60, %s74
    %p76 = scmp.eq.s32.totalorder %s15, 0
    %p77 = por %p75, %p76
    %s79 = sadd.s32 %s78, 1
    %p82 = scmp.eq.s32.totalorder %s9, 3
    %p83 = scmp.ne.s32.totalorder %s78, %s80
    %p84 = scmp.eq.s32.totalorder %s9, 0
    %p85 = por %p83, %p84
    %p86 = scmp.ne.s32.totalorder %s78, %s80
    %p87 = scmp.eq.s32.totalorder %s14, 3
    %p88 = por %p86, %p87
    %p89 = scmp.ne.s32.totalorder %s80, %s81
    %p90 = scmp.eq.s32.totalorder %s14, 0
    %p91 = por %p89, %p90
    %p92 = scmp.ne.s32.totalorder %s80, %s81
    %p93 = scmp.eq.s32.totalorder %s15, 3
    %p94 = por %p92, %p93
    %p96 = scmp.ne.s32.totalorder %s81, %s95
    %p97 = scmp.eq.s32.totalorder %s15, 0
    %p98 = por %p96, %p97
    %s99 = ssub.s32 %s16, %s28
    %s100 = ssub.s32 %s17, %s24
    %s101 = sor.u32 %s99, %s100
    %p102 = scmp.eq.s32.totalorder %s101, 0
    %s104 = sadd.s32 %s103, 1
    %s105 = scalar_select %p102, %s103, %s104
    %p108 = pneg %p102
    %p109 = scmp.eq.s32.totalorder %s9, 3
    %p110 = por %p108, %p109
    %p111 = scmp.ne.s32.totalorder %s103, %s106
    %p112 = scmp.eq.s32.totalorder %s9, 0
    %p113 = por %p111, %p112
    %p114 = scmp.ne.s32.totalorder %s103, %s106
    %p115 = scmp.eq.s32.totalorder %s14, 3
    %p116 = por %p114, %p115
    %p117 = scmp.ne.s32.totalorder %s106, %s107
    %p118 = scmp.eq.s32.totalorder %s14, 0
    %p119 = por %p117, %p118
    %p120 = scmp.ne.s32.totalorder %s106, %s107
    %p121 = scmp.eq.s32.totalorder %s15, 3
    %p122 = por %p120, %p121
    %p124 = scmp.ne.s32.totalorder %s107, %s123
    %p125 = scmp.eq.s32.totalorder %s15, 0
    %p126 = por %p124, %p125
    %p127 = scmp.le.s32.totalorder 1, %s9
    %p128 = scmp.lt.s32.totalorder %s9, 5
    %p129 = pnand %p127, %p128
    %p130 = pneg %p129
    // Predicated region
    $region9: #{deconv_layer_forward.3} parent=5 // pred_check
      _
    $region10: #{deconv_layer_forward.3} parent=5 // pred_check_branch
      %132 = sbr.rel (%p129) target = $region12
    $region11: #{deconv_layer_forward.3} parent=5 // pred_region
      %s133 = ssub.s32 %s9, 1
      // Predicated region
      $region13: #{deconv_layer_forward.3} parent=11 // pred_check
        %p134 = pneg %p70
      $region14: #{deconv_layer_forward.3} parent=11 // pred_check_branch
        %136 = sbr.rel (%p134) target = $region16
      $region15: #{deconv_layer_forward.3} parent=11 // pred_region
        _
      $region16: #{deconv_layer_forward.3} parent=11 // pred_fallthru
        _
      // Predicated region
      $region17: #{deconv_layer_forward.3} parent=11 // pred_check
        %p137 = pneg %p91
      $region18: #{deconv_layer_forward.3} parent=11 // pred_check_branch
        %139 = sbr.rel (%p137) target = $region20
      $region19: #{deconv_layer_forward.3} parent=11 // pred_region
        _
      $region20: #{deconv_layer_forward.3} parent=11 // pred_fallthru
        _
    $region12: #{deconv_layer_forward.3} parent=5 // pred_fallthru
      _
    %p140 = scmp.lt.s32.totalorder %s9, 4
    // Predicated region
    $region21: #{deconv_layer_forward.3} parent=5 // pred_check
      %p141 = pneg %p140
    $region22: #{deconv_layer_forward.3} parent=5 // pred_check_branch
      %143 = sbr.rel (%p141) target = $region24
    $region23: #{deconv_layer_forward.3} parent=5 // pred_region
      // Predicated region
      $region25: #{deconv_layer_forward.3} parent=23 // pred_check
        %p144 = pneg %p43
      $region26: #{deconv_layer_forward.3} parent=23 // pred_check_branch
        %146 = sbr.rel (%p144) target = $region28
      $region27: #{deconv_layer_forward.3} parent=23 // pred_region
        %s147 = smul.u32 4, %s17
        %p148 = scmp.lt.s32.totalorder %s16, 1
        %s149 = scalar_select %p148, %s16, 1
        %p150 = scmp.lt.s32.totalorder %s147, 7
        %s151 = scalar_select %p150, %s147, 7
        %s152 = smul.addr %s149, 8
        %s153 = sadd.s32 %s151, %s152
        %s154 = smul.addr %s153, 8
        %s155 = scalar_lea.vmem %s0, %s154
        %s156 = smul.u32 4, %s17
      $region28: #{deconv_layer_forward.3} parent=23 // pred_fallthru
        _
    $region24: #{deconv_layer_forward.3} parent=5 // pred_fallthru
      _
    %p157 = scmp.le.s32.totalorder 1, %s9
    %p158 = scmp.lt.s32.totalorder %s9, 5
    %p159 = pnand %p157, %p158
    %p160 = pneg %p159
    // Predicated region
    $region29: #{deconv_layer_forward.3} parent=5 // pred_check
      _
    $region30: #{deconv_layer_forward.3} parent=5 // pred_check_branch
      %162 = sbr.rel (%p159) target = $region32
    $region31: #{deconv_layer_forward.3} parent=5 // pred_region
      %s163 = ssub.s32 %s9, 1
      %s164 = smul.u32 4, %s19
      %p165 = scmp.lt.s32.totalorder %s18, 1
      %s166 = scalar_select %p165, %s18, 1
      %p167 = scmp.lt.s32.totalorder %s164, 7
      %s168 = scalar_select %p167, %s164, 7
      %s169 = smul.addr %s166, 8
      %s170 = sadd.s32 %s168, %s169
      %s171 = smul.addr %s170, 8
      %s172 = scalar_lea.vmem %s0, %s171
      %p173 = pneg %p49
      %p174 = pneg %p46
      %p175 = pneg %p70
      %p176 = pneg %p67
      %p177 = pneg %p91
      %p178 = pneg %p88
      %p179 = pneg %p119
      %p180 = pneg %p116
      %s181 = smul.u32 4, %s19
      %p182 = scmp.lt.s32.totalorder %s18, 1
      %s183 = scalar_select %p182, %s18, 1
      %p184 = scmp.lt.s32.totalorder %s181, 7
      %s185 = scalar_select %p184, %s181, 7
      %s186 = smul.addr %s183, 8
      %s187 = sadd.s32 %s185, %s186
      %s188 = smul.addr %s187, 8
      %s189 = scalar_lea.vmem %s3, %s188
      %s190 = smul.u32 4, %s19
      %p191 = scmp.lt.s32.totalorder %s18, 1
      %s192 = scalar_select %p191, %s18, 1
      %p193 = scmp.lt.s32.totalorder %s190, 7
      %s194 = scalar_select %p193, %s190, 7
      %s195 = smul.addr %s192, 8
      %s196 = sadd.s32 %s194, %s195
      %s197 = smul.addr %s196, 8
      %s198 = scalar_lea.vmem %s0, %s197
      %s199 = smul.u32 4, %s19
      %s200 = smul.u32 4, %s19
      %p201 = scmp.lt.s32.totalorder %s18, 1
      %s202 = scalar_select %p201, %s18, 1
      %p203 = scmp.lt.s32.totalorder %s200, 7
      %s204 = scalar_select %p203, %s200, 7
      %s205 = smul.addr %s202, 8
      %s206 = sadd.s32 %s204, %s205
      %s207 = smul.addr %s206, 8
      %s208 = scalar_lea.vmem %s3, %s207
      %s209 = smul.u32 4, %s19
      %v210 = vld [vmem:[%s198] sm:$0xff]
      %v211 = vld [vmem:[%s198 + $0x8] sm:$0xff]
      %v212 = vld [vmem:[%s198 + $0x10] sm:$0xff]
      %v213 = vld [vmem:[%s198 + $0x18] sm:$0xff]
      %v214 = vld [vmem:[%s1] sm:$0xff]
      %216 = vset.pattern.permute.xlu0 0
      %217 = vperm.xlu0 %216, %v214
      %v218 = vpop.permute.xlu0 %217
      %v220 = vmul.f32 %v210, %v218
      %v221 = vmul.f32 %v211, %v218
      %v222 = vmul.f32 %v212, %v218
      %v223 = vmul.f32 %v213, %v218
      %v224 = vld [vmem:[%s2] sm:$0xff]
      %226 = vset.pattern.permute.xlu0 0
      %227 = vperm.xlu0 %226, %v224
      %v228 = vpop.permute.xlu0 %227
      %v230 = vadd.f32 %v220, %v228
      %v231 = vadd.f32 %v221, %v228
      %v232 = vadd.f32 %v222, %v228
      %v233 = vadd.f32 %v223, %v228
      %v234 = vmax.f32 %v230, 0.0
      %v235 = vmax.f32 %v231, 0.0
      %v236 = vmax.f32 %v232, 0.0
      %v237 = vmax.f32 %v233, 0.0
      %238 = vst [vmem:[%s208] sm:$0xff] %v234
      %239 = vst [vmem:[%s208 + $0x8] sm:$0xff] %v235
      %240 = vst [vmem:[%s208 + $0x10] sm:$0xff] %v236
      %241 = vst [vmem:[%s208 + $0x18] sm:$0xff] %v237
      %s242 = smul.u32 4, %s19
      %p243 = scmp.lt.s32.totalorder %s18, 1
      %s244 = scalar_select %p243, %s18, 1
      %p245 = scmp.lt.s32.totalorder %s242, 7
      %s246 = scalar_select %p245, %s242, 7
      %s247 = smul.addr %s244, 8
      %s248 = sadd.s32 %s246, %s247
      %s249 = smul.addr %s248, 8
      %s250 = scalar_lea.vmem %s3, %s249
      // Predicated region
      $region33: #{deconv_layer_forward.3} parent=31 // pred_check
        %p251 = pneg %p116
      $region34: #{deconv_layer_forward.3} parent=31 // pred_check_branch
        %253 = sbr.rel (%p251) target = $region36
      $region35: #{deconv_layer_forward.3} parent=31 // pred_region
        %s254 = smul.u32 4, %s19
      $region36: #{deconv_layer_forward.3} parent=31 // pred_fallthru
        _
    $region32: #{deconv_layer_forward.3} parent=5 // pred_fallthru
      _
    %p255 = scmp.le.s32.totalorder 2, %s9
    // Predicated region
    $region37: #{deconv_layer_forward.3} parent=5 // pred_check
      %p256 = pneg %p255
    $region38: #{deconv_layer_forward.3} parent=5 // pred_check_branch
      %258 = sbr.rel (%p256) target = $region40
    $region39: #{deconv_layer_forward.3} parent=5 // pred_region
      %s259 = ssub.s32 %s9, 2
      // Predicated region
      $region41: #{deconv_layer_forward.3} parent=39 // pred_check
        %p260 = pneg %p122
      $region42: #{deconv_layer_forward.3} parent=39 // pred_check_branch
        %262 = sbr.rel (%p260) target = $region44
      $region43: #{deconv_layer_forward.3} parent=39 // pred_region
        %s263 = smul.u32 4, %s21
        %p264 = scmp.lt.s32.totalorder %s20, 1
        %s265 = scalar_select %p264, %s20, 1
        %p266 = scmp.lt.s32.totalorder %s263, 7
        %s267 = scalar_select %p266, %s263, 7
        %s268 = smul.addr %s265, 8
        %s269 = sadd.s32 %s267, %s268
        %s270 = smul.addr %s269, 8
        %s271 = scalar_lea.vmem %s3, %s270
      $region44: #{deconv_layer_forward.3} parent=39 // pred_fallthru
        _
    $region40: #{deconv_layer_forward.3} parent=5 // pred_fallthru
      _
  $region6: #{deconv_layer_forward.3} parent=0 // loop_footer
    %s13 = sadd.s32 1, %s9
  $region7: #{deconv_layer_forward.3} parent=0 // loop_footer_branch
    %8 = sbr.rel target = $region3
  $region8: #{deconv_layer_forward.3} parent=0 // loop_exit
    _

</llo_original>
